<compile_context>
chip_gen: v7x
topology: tpu7x:2x2x1
jax: 0.10.0
libtpu: 0.0.40
codegen_flags: <defaults>
</compile_context>

<pallas_src>
import jax
import jax.numpy as jnp
from jax.experimental import pallas as pl
from jax.experimental.pallas import tpu as pltpu

_LANE = 128
_SUBLANE = 8
_VMEM_SOFT_BUDGET = 24 * 1024 * 1024  # headroom under the 32 MiB scoped default (v6e/v7x)


# ----------------------------------------------------------------------------
# Tile-size helpers
# ----------------------------------------------------------------------------
def _pick_row_tile(m, preferred):
    """Largest sublane-aligned divisor of m that is <= preferred (else m itself)."""
    if m <= preferred:
        return m
    cand = preferred - (preferred % _SUBLANE)
    while cand >= _SUBLANE:
        if m % cand == 0:
            return cand
        cand -= _SUBLANE
    return m


def _pick_lane_tile(n, preferred=512):
    """Largest 128-multiple divisor of n <= preferred; prefer >=2 blocks (v7x 2 TCs)."""
    cand = min(preferred, n)
    cand -= cand % _LANE
    while cand > _LANE and n % cand != 0:
        cand -= _LANE
    cand = max(cand, _LANE)
    if n // cand < 2 and n >= 2 * _LANE:
        half = n // 2
        half -= half % _LANE
        while half > _LANE and n % half != 0:
            half -= _LANE
        if half >= _LANE and n % half == 0:
            cand = half
    return cand


def _vmem_bytes(bm, bk, bn):
    # double-buffered bf16 x & w tiles + f32 bias + double-buffered f32 output tile
    return 2 * (bm * bk * 2 + bk * bn * 2 + bn * 4 + bm * bn * 4)


def _pick_k_tile(in_dim, bm, bn):
    if _vmem_bytes(bm, in_dim, bn) <= _VMEM_SOFT_BUDGET:
        return in_dim  # collapse K: single MXU pass, no accumulator traffic
    cand = 512
    while cand >= _LANE:
        if in_dim % cand == 0 and _vmem_bytes(bm, cand, bn) <= _VMEM_SOFT_BUDGET:
            return cand
        cand -= _LANE
    return in_dim  # can't tile K cleanly; fall back to full K (vmem limit raised below)


# ----------------------------------------------------------------------------
# 1) Literal module forward: identity (tiled, lane-dense copy).
# ----------------------------------------------------------------------------
def _copy_kernel(x_ref, o_ref):
    o_ref[...] = x_ref[...]


def identity_forward(x):
    """forward(x) -> x. In production just `return x`; kernel kept for completeness."""
    x2 = x.reshape(-1, x.shape[-1]) if x.ndim != 2 else x
    m, d = x2.shape
    tm = _pick_row_tile(m, 512)
    out = pl.pallas_call(
        _copy_kernel,
        out_shape=jax.ShapeDtypeStruct((m, d), x2.dtype),
        grid_spec=pltpu.PrefetchScalarGridSpec(
            num_scalar_prefetch=0,
            grid=(m // tm,),
            in_specs=[pl.BlockSpec((tm, d), lambda i: (i, 0))],
            out_specs=pl.BlockSpec((tm, d), lambda i: (i, 0)),
        ),
        compiler_params=pltpu.CompilerParams(dimension_semantics=("parallel",)),
    )(x2)
    return out.reshape(x.shape)


# ----------------------------------------------------------------------------
# 2) Fused expert bank: sigmoid(x @ W_e.T + b_e) for all E experts in one call.
# ----------------------------------------------------------------------------
def pack_expert_params(weights, biases, *, compute_dtype=jnp.bfloat16):
    """ONE-TIME re-layout of per-expert Linear params (call at init, not per forward).

    weights: (E, out_dim, in_dim)  -- PyTorch nn.Linear convention
    biases:  (E, out_dim)
    Returns: w_packed (in_dim, N_pad) compute_dtype, b_packed (1, N_pad) float32,
             where N_pad = round_up(E*out_dim, 128) so stores are lane-dense.
    """
    e, out_dim, in_dim = weights.shape
    n = e * out_dim
    pad = (-n) % _LANE
    w = jnp.transpose(weights, (2, 0, 1)).reshape(in_dim, n)
    b = biases.reshape(1, n)
    if pad:
        w = jnp.pad(w, ((0, 0), (0, pad)))
        b = jnp.pad(b, ((0, 0), (0, pad)))
    return w.astype(compute_dtype), b.astype(jnp.float32)


def _experts_kernel(x_ref, w_ref, b_ref, o_ref):
    # Whole reduction dim in one MXU pass: no VMEM accumulator round-trips.
    z = jnp.dot(x_ref[...], w_ref[...], preferred_element_type=jnp.float32)
    o_ref[...] = jax.nn.sigmoid(z + b_ref[...]).astype(o_ref.dtype)


def _experts_kernel_ktiled(x_ref, w_ref, b_ref, o_ref):
    # Fallback for very large in_dim: accumulate directly into the resident f32 output.
    k = pl.program_id(2)

    @pl.when(k == 0)
    def _init():
        o_ref[...] = jnp.zeros_like(o_ref)

    o_ref[...] += jnp.dot(x_ref[...], w_ref[...], preferred_element_type=jnp.float32)

    @pl.when(k == pl.num_programs(2) - 1)
    def _finalize():
        o_ref[...] = jax.nn.sigmoid(o_ref[...] + b_ref[...])


def fused_experts_forward(x, w_packed, b_packed, num_experts, out_dim,
                          *, bm=None, bn=None, bk=None, out_dtype=jnp.float32):
    """All-experts forward in one pallas_call.

    x:        (B, in_dim)
    w_packed: (in_dim, N_pad) bf16 from pack_expert_params (pre-transposed, lane-padded)
    b_packed: (1, N_pad) float32
    returns:  (B, num_experts, out_dim) = sigmoid(x @ W_e.T + b_e) per expert e
    """
    batch, in_dim = x.shape
    k_dim, n_pad = w_packed.shape
    assert k_dim == in_dim and b_packed.shape == (1, n_pad)
    n_valid = num_experts * out_dim

    bm = _pick_row_tile(batch, 256) if bm is None else bm
    bn = _pick_lane_tile(n_pad, 512) if bn is None else bn
    bk = _pick_k_tile(in_dim, bm, bn) if bk is None else bk
    assert batch % bm == 0 and n_pad % bn == 0 and in_dim % bk == 0

    x_in = x.astype(w_packed.dtype)  # bf16 into the MXU; accumulation stays f32
    collapse_k = (bk == in_dim)
    acc_dtype = out_dtype if collapse_k else jnp.float32

    cost = pl.CostEstimate(
        flops=2 * batch * in_dim * n_pad,
        transcendentals=batch * n_pad,
        bytes_accessed=(x_in.size * x_in.dtype.itemsize
                        + w_packed.size * w_packed.dtype.itemsize
                        + b_packed.size * 4
                        + batch * n_pad * jnp.dtype(acc_dtype).itemsize),
    )

    cp_kwargs = {}
    est = _vmem_bytes(bm, bk, bn)
    if est > 28 * 1024 * 1024:
        # TODO(synk): re-derive per-chip budget (v7x has only 64 MiB physical VMEM).
        cp_kwargs["vmem_limit_bytes"] = min(int(est * 5 // 4), 56 * 1024 * 1024)

    if collapse_k:
        grid_spec = pltpu.PrefetchScalarGridSpec(
            num_scalar_prefetch=0,
            grid=(batch // bm, n_pad // bn),
            in_specs=[
                pl.BlockSpec((bm, bk), lambda i, j: (i, 0)),   # x tile (bf16)
                pl.BlockSpec((bk, bn), lambda i, j: (0, j)),   # stacked weight tile (bf16)
                pl.BlockSpec((1, bn), lambda i, j: (0, j)),    # stacked bias (f32)
            ],
            out_specs=pl.BlockSpec((bm, bn), lambda i, j: (i, j)),  # lane-dense output
        )
        kernel, semantics = _experts_kernel, ("parallel", "parallel")
    else:
        grid_spec = pltpu.PrefetchScalarGridSpec(
            num_scalar_prefetch=0,
            grid=(batch // bm, n_pad // bn, in_dim // bk),  # reduction axis last
            in_specs=[
                pl.BlockSpec((bm, bk), lambda i, j, k: (i, k)),
                pl.BlockSpec((bk, bn), lambda i, j, k: (k, j)),
                pl.BlockSpec((1, bn), lambda i, j, k: (0, j)),
            ],
            out_specs=pl.BlockSpec((bm, bn), lambda i, j, k: (i, j)),
        )
        kernel, semantics = _experts_kernel_ktiled, ("parallel", "parallel", "arbitrary")

    out = pl.pallas_call(
        kernel,
        out_shape=jax.ShapeDtypeStruct((batch, n_pad), acc_dtype),
        grid_spec=grid_spec,
        compiler_params=pltpu.CompilerParams(dimension_semantics=semantics, **cp_kwargs),
        cost_estimate=cost,
    )(x_in, w_packed, b_packed)

    if n_pad != n_valid:
        out = out[:, :n_valid]
    return out.reshape(batch, num_experts, out_dim).astype(out_dtype)


# ----------------------------------------------------------------------------
# Reference (pure JAX)
# ----------------------------------------------------------------------------
def reference_experts(x, weights, biases):
    z = jnp.einsum("bi,eoi->beo", x, weights,
                   precision=jax.lax.Precision.HIGHEST) + biases[None]
    return jax.nn.sigmoid(z)


if __name__ == "__main__":
    # Small shapes consistent with the module family: 8 experts of Linear(32 -> 16), batch 8.
    B, IN_DIM, OUT_DIM, E = 8, 32, 16, 8

    key = jax.random.PRNGKey(0)
    kx, kw, kb = jax.random.split(key, 3)

    x = jax.random.normal(kx, (B, IN_DIM), dtype=jnp.float32)
    bound = 1.0 / (IN_DIM ** 0.5)
    weights = jax.random.uniform(kw, (E, OUT_DIM, IN_DIM),
                                 minval=-bound, maxval=bound, dtype=jnp.float32)
    biases = jax.random.uniform(kb, (E, OUT_DIM),
                                minval=-bound, maxval=bound, dtype=jnp.float32)

    # 1) Literal module forward (identity).
    y_id = jax.block_until_ready(identity_forward(x))
    assert y_id.shape == x.shape and y_id.dtype == x.dtype
    assert jnp.array_equal(y_id, x), "identity mismatch"

    # 2) Fused expert bank: pack once at "init time", then run the kernel.
    w_packed, b_packed = pack_expert_params(weights, biases)
    out = jax.block_until_ready(
        fused_experts_forward(x, w_packed, b_packed, E, OUT_DIM))
    ref = reference_experts(x, weights, biases)
    assert out.shape == (B, E, OUT_DIM)
    # bf16 MXU operands vs f32 HIGHEST reference -> modest tolerance.
    assert jnp.allclose(out, ref, atol=1e-2, rtol=1e-2), "expert bank mismatch vs reference"

    print("KERNEL_OK")
</pallas_src>

<mosaic_0001>
module attributes {stable_mosaic.version = 11 : i64} {
  func.func @_copy_kernel(%arg0: i32, %arg1: memref<8x32xf32, #tpu.memory_space<vmem>>, %arg2: memref<8x32xf32, #tpu.memory_space<vmem>>) attributes {dimension_semantics = [#tpu.dimension_semantics<parallel>], iteration_bounds = array<i64: 1>, scalar_prefetch = 0 : i64, scratch_operands = 0 : i64, tpu.core_type = #tpu.core_type<tc>, window_params = [{transform_indices = @transform_0, window_bounds = array<i64: 8, 32>}, {transform_indices = @transform_1, window_bounds = array<i64: 8, 32>}]} {
    %c0 = arith.constant 0 : index
    %c0_0 = arith.constant 0 : index
    %0 = vector.load %arg1[%c0, %c0_0] : memref<8x32xf32, #tpu.memory_space<vmem>>, vector<8x32xf32>
    %c0_1 = arith.constant 0 : index
    %c0_2 = arith.constant 0 : index
    %1 = vector.load %arg2[%c0_1, %c0_2] : memref<8x32xf32, #tpu.memory_space<vmem>>, vector<8x32xf32>
    tpu.vector_store %arg2[%c0_1, %c0_2], %0 {strides = array<i32>} : memref<8x32xf32, #tpu.memory_space<vmem>>, vector<8x32xf32>,
    return
  }
  func.func @transform_0(%arg0: i32) -> (i32, i32) {
    %c0_i32 = arith.constant 0 : i32
    %c0_i32_0 = arith.constant 0 : i32
    return %arg0, %c0_i32 : i32, i32
  }
  func.func @transform_1(%arg0: i32) -> (i32, i32) {
    %c0_i32 = arith.constant 0 : i32
    %c0_i32_0 = arith.constant 0 : i32
    return %arg0, %c0_i32 : i32, i32
  }
}

</mosaic_0001>

<llo_original>
// kernel: tpu_custom_call.1
$region0: #{tpu_custom_call.1}
  #allocation0 [shape = 'u32[]', space=smem, size = 0x4, offset = 0x4, fixed_abs, tag = 'smem constant byte address 0x4 - core index']
  #allocation1 [shape = 'u32[144,128]{1,0:T(1,128)}', space=vmem, size = 0x12000, scoped, tag = 'internal scratch']
  %s0 = inlined_call_operand.hbm [shape: f32[8,32], index: 0, kind: input, shape index: {}]
  %s1 = inlined_call_operand.hbm [shape: f32[8,32], index: 1, kind: output, shape index: {}]
  %s2 = sld [smem:[#allocation0]]
  $region18: #{tpu_custom_call.1} parent=0
    _
  %s4 = ssub.s32 1, %s2
  %s5 = scalar_select 0, %s4, %s2
  $region1: #{tpu_custom_call.1} parent=0
    #allocation2 [shape = 'u8[4096]{0}', space=vmem, size = 0x1000, scoped, tag = 'input window, operand 0, single buffered']
    #allocation3 [shape = 's32[1]{0}', space=sflag, size = 0x4, scoped, tag = 'scoped memory for tpu_custom_call.1']
    #allocation4 [shape = 's32[1]{0}', space=sflag, size = 0x4, scoped, tag = 'scoped memory for tpu_custom_call.1']
    #allocation5 [shape = 'u8[4096]{0}', space=vmem, size = 0x1000, scoped, tag = 'output window, operand 0, single buffered']
    %6 = vsyncpa [#allocation3], 0
    %7 = vsyncpa [#allocation4], 0
    // Predicated region
    $region2: #{tpu_custom_call.1} parent=1 // pred_check
      _
    $region3: #{tpu_custom_call.1} parent=1 // pred_check_branch
      %9 = sbr.rel (0) target = $region5
    $region4: #{tpu_custom_call.1} parent=1 // pred_region
      %s11 = ssub.s32 128, 128
      %12 = vsyncadd [#allocation3], %s11
      %s14 = sshll.u32 [#allocation2], 4
      %s15 = int_to_ptr.vmem [resolvable:$true] %s14
      %17 = dma.hbm_to_vmem [thread:$0]  %s0, 128, %s15, [#allocation3]
    $region5: #{tpu_custom_call.1} parent=1 // pred_fallthru
      _
    // Predicated region
    $region6: #{tpu_custom_call.1} parent=1 // pred_check
      _
    $region7: #{tpu_custom_call.1} parent=1 // pred_check_branch
      %19 = sbr.rel (0) target = $region9
    $region8: #{tpu_custom_call.1} parent=1 // pred_region
      %20 = dma.done [#allocation3], 128
    $region9: #{tpu_custom_call.1} parent=1 // pred_fallthru
      _
    %v21 = vld [vmem:[#allocation2] sm:$0xff]
    %vm22 = vcmask 261120
    %23 = vst.msk [vmem:[#allocation5] sm:$0xff] %vm22, %v21
    // Predicated region
    $region10: #{tpu_custom_call.1} parent=1 // pred_check
      _
    $region11: #{tpu_custom_call.1} parent=1 // pred_check_branch
      %25 = sbr.rel (0) target = $region13
    $region12: #{tpu_custom_call.1} parent=1 // pred_region
      %s27 = ssub.s32 128, 128
      %28 = vsyncadd [#allocation4], %s27
      %s30 = sshll.u32 [#allocation5], 4
      %s31 = int_to_ptr.vmem [resolvable:$true] %s30
      %33 = dma.vmem_to_hbm [thread:$0]  %s31, 128, %s1, [#allocation4]
    $region13: #{tpu_custom_call.1} parent=1 // pred_fallthru
      _
    // Predicated region
    $region14: #{tpu_custom_call.1} parent=1 // pred_check
      _
    $region15: #{tpu_custom_call.1} parent=1 // pred_check_branch
      %35 = sbr.rel (0) target = $region17
    $region16: #{tpu_custom_call.1} parent=1 // pred_region
      %36 = dma.done [#allocation4], 128
    $region17: #{tpu_custom_call.1} parent=1 // pred_fallthru
      _
    %37 = vsyncpa [#allocation3], 1
    %38 = vsyncpa [#allocation4], 1

</llo_original>
